<compile_context>
chip_gen: v5e
topology: v5e:2x2
jax: 0.10.0
libtpu: 0.0.40
codegen_flags: <defaults>
</compile_context>

<pallas_src>
import jax
import jax.numpy as jnp
from jax.experimental import pallas as pl
from jax.experimental.pallas import tpu as pltpu


def discriminator_kernel(x_ref, w1_ref, b1_ref, w2_ref, b2_ref, y_ref):
    # ----- Layer 1: Linear(input -> hidden) on the MXU, f32 accumulation -------
    h = jnp.dot(x_ref[...], w1_ref[...], preferred_element_type=jnp.float32)
    h = jnp.maximum(h + b1_ref[...], 0.0)                    # (TB, H) bias + ReLU

    # ----- Layer 2: Linear(hidden -> 1) as VPU mul + XLU lane-reduce -----------
    # w2 is (1, H) (PyTorch layout): it broadcasts across the batch sublanes and
    # the reduction happens over lanes while the MXU result path is free.
    o = jnp.sum(h * w2_ref[...], axis=-1, keepdims=True)     # (TB, 1)
    o = jnp.maximum(o + b2_ref[0, 0], 0.0)                   # scalar bias from SMEM + ReLU

    # ----- Sigmoid: EUP exp + EUP approximate reciprocal ------------------------
    # o >= 0 after the ReLU, so exp(-o) in (0, 1] and 1 + e in (1, 2]: well conditioned.
    e = jnp.exp(-o)
    y_ref[...] = pl.reciprocal(1.0 + e, approx=True).astype(y_ref.dtype)


def discriminator_forward(x, w1, b1, w2, b2, *, block_batch=128, matmul_dtype=None):
    """x: (B, input_size); w1: (input_size, hidden) [transposed vs PyTorch];
    b1: (1, hidden); w2: (1, hidden) [PyTorch layout]; b2: (1, 1).
    Returns (B, 1) float32.

    block_batch: rows per grid step. For real GAN training batches push this to
    512-1024 on v5e/v6e; roughly halve it on v7x (64 MiB physical VMEM).
    matmul_dtype: set to jnp.bfloat16 on v6e/v7x to feed the MXU bf16 operands
    (f32 accumulation and all f32 elementwise work are preserved)."""
    if matmul_dtype is not None:
        x = x.astype(matmul_dtype)
        w1 = w1.astype(matmul_dtype)

    B, in_size = x.shape
    tb = min(block_batch, B)
    grid = (pl.cdiv(B, tb),)

    return pl.pallas_call(
        discriminator_kernel,
        out_shape=jax.ShapeDtypeStruct((B, 1), jnp.float32),
        grid=grid,
        in_specs=[
            pl.BlockSpec((tb, in_size), lambda i: (i, 0)),      # x: streamed per batch tile
            pl.BlockSpec(w1.shape, lambda i: (0, 0)),           # w1: VMEM-resident
            pl.BlockSpec(b1.shape, lambda i: (0, 0)),           # b1: VMEM-resident
            pl.BlockSpec(w2.shape, lambda i: (0, 0)),           # w2: VMEM-resident
            pl.BlockSpec(memory_space=pltpu.MemorySpace.SMEM),  # b2: scalar in SMEM
        ],
        out_specs=pl.BlockSpec((tb, 1), lambda i: (i, 0)),
        # TODO(synk): for very large B with output_size=1, a lane-dense output slab
        # ((num_tiles, TB) reshaped in the wrapper) would avoid 1-of-128-lane masked stores.
        compiler_params=pltpu.CompilerParams(
            dimension_semantics=("parallel",),   # use both TensorCores on v7x
            vmem_limit_bytes=48 << 20,           # stays inside v7x's 64 MiB physical VMEM
        ),
    )(x, w1, b1, w2, b2)


def init_params(key, input_size, hidden_size, output_size):
    """Deterministic init mirroring nn.Linear's default U(-1/sqrt(fan_in), +1/sqrt(fan_in)).
    w1 is stored transposed vs PyTorch ((in, hidden)); w2 is kept in PyTorch
    layout ((out, hidden)) so the in-kernel lane reduction needs no transpose."""
    assert output_size == 1, "kernel's layer-2 lane reduction assumes output_size == 1"
    k1, k2, k3, k4 = jax.random.split(key, 4)
    lim1 = 1.0 / jnp.sqrt(float(input_size))
    lim2 = 1.0 / jnp.sqrt(float(hidden_size))
    w1 = jax.random.uniform(k1, (input_size, hidden_size), jnp.float32, -lim1, lim1)
    b1 = jax.random.uniform(k2, (1, hidden_size), jnp.float32, -lim1, lim1)
    w2 = jax.random.uniform(k3, (output_size, hidden_size), jnp.float32, -lim2, lim2)
    b2 = jax.random.uniform(k4, (1, 1), jnp.float32, -lim2, lim2)
    return w1, b1, w2, b2


if __name__ == "__main__":
    # Small-but-tiled shapes consistent with the vanilla-GAN discriminator:
    # batch=256 (2 grid steps of 128), input_size=32, hidden_size=128, output_size=1.
    batch, input_size, hidden_size, output_size = 256, 32, 128, 1

    key = jax.random.PRNGKey(0)
    kx, kp = jax.random.split(key)
    x = jax.random.normal(kx, (batch, input_size), dtype=jnp.float32)
    w1, b1, w2, b2 = init_params(kp, input_size, hidden_size, output_size)

    y = jax.block_until_ready(discriminator_forward(x, w1, b1, w2, b2))

    # Pure-JAX reference. (The ReLU before sigmoid is faithful to the PyTorch
    # source, so outputs live in [0.5, 1) -- intended semantics of the port.)
    h_ref = jnp.maximum(x @ w1 + b1, 0.0)
    o_ref = jnp.maximum(h_ref @ w2.T + b2, 0.0)
    y_ref = jax.nn.sigmoid(o_ref)
    assert y.shape == (batch, output_size)
    # Slightly relaxed tolerance: the sigmoid uses the approximate EUP reciprocal.
    assert jnp.allclose(y, y_ref, atol=2e-3, rtol=2e-3)

    # bf16-MXU fast path (v6e/v7x feedback); loose tolerance since operands are bf16-rounded.
    y_bf16 = jax.block_until_ready(
        discriminator_forward(x, w1, b1, w2, b2, matmul_dtype=jnp.bfloat16))
    assert y_bf16.shape == (batch, output_size)
    assert jnp.allclose(y_bf16, y_ref, atol=5e-2, rtol=5e-2)

    print("KERNEL_OK")
</pallas_src>

<mosaic_0001>
module attributes {stable_mosaic.version = 11 : i64} {
  func.func @discriminator_kernel(%arg0: i32, %arg1: memref<128x32xf32, #tpu.memory_space<vmem>>, %arg2: memref<32x128xf32, #tpu.memory_space<vmem>>, %arg3: memref<1x128xf32, #tpu.memory_space<vmem>>, %arg4: memref<1x128xf32, #tpu.memory_space<vmem>>, %arg5: memref<1x1xf32, #tpu.memory_space<smem>>, %arg6: memref<128x1xf32, #tpu.memory_space<vmem>>) attributes {dimension_semantics = [#tpu.dimension_semantics<parallel>], iteration_bounds = array<i64: 2>, scalar_prefetch = 0 : i64, scratch_operands = 0 : i64, tpu.core_type = #tpu.core_type<tc>, window_params = [{transform_indices = @transform_0, window_bounds = array<i64: 128, 32>}, {pipeline_mode = #tpu.pipeline_mode<synchronous>, transform_indices = @transform_1, window_bounds = array<i64: 32, 128>}, {pipeline_mode = #tpu.pipeline_mode<synchronous>, transform_indices = @transform_2, window_bounds = array<i64: 1, 128>}, {pipeline_mode = #tpu.pipeline_mode<synchronous>, transform_indices = @transform_3, window_bounds = array<i64: 1, 128>}, {transform_indices = @transform_4, window_bounds = array<i64: 1, 1>}, {transform_indices = @transform_5, window_bounds = array<i64: 128, 1>}]} {
    %c0 = arith.constant 0 : index
    %c0_0 = arith.constant 0 : index
    %0 = vector.load %arg1[%c0, %c0_0] : memref<128x32xf32, #tpu.memory_space<vmem>>, vector<128x32xf32>
    %c0_1 = arith.constant 0 : index
    %c0_2 = arith.constant 0 : index
    %1 = vector.load %arg2[%c0_1, %c0_2] : memref<32x128xf32, #tpu.memory_space<vmem>>, vector<32x128xf32>
    %cst = arith.constant dense<0.000000e+00> : vector<128x128xf32>
    %2 = tpu.matmul %0, %1, %cst {dimension_numbers = #tpu.dot_dimension_numbers<[1], [0], [0], [1], [0, 0, 1, 1], [], []>} : vector<128x32xf32>, vector<32x128xf32>, vector<128x128xf32> -> vector<128x128xf32>
    %c0_3 = arith.constant 0 : index
    %c0_4 = arith.constant 0 : index
    %3 = vector.load %arg3[%c0_3, %c0_4] : memref<1x128xf32, #tpu.memory_space<vmem>>, vector<1x128xf32>
    %4 = vector.broadcast %3 : vector<1x128xf32> to vector<128x128xf32>
    %5 = arith.addf %2, %4 : vector<128x128xf32>
    %cst_5 = arith.constant 0.000000e+00 : f32
    %6 = vector.broadcast %cst_5 : f32 to vector<128x128xf32>
    %7 = arith.maximumf %5, %6 : vector<128x128xf32>
    %c0_6 = arith.constant 0 : index
    %c0_7 = arith.constant 0 : index
    %8 = vector.load %arg4[%c0_6, %c0_7] : memref<1x128xf32, #tpu.memory_space<vmem>>, vector<1x128xf32>
    %9 = vector.broadcast %8 : vector<1x128xf32> to vector<128x128xf32>
    %10 = arith.mulf %7, %9 : vector<128x128xf32>
    %cst_8 = arith.constant dense<0.000000e+00> : vector<128xf32>
    %11 = vector.multi_reduction <add>, %10, %cst_8 [1] : vector<128x128xf32> to vector<128xf32>
    %12 = vector.shape_cast %11 : vector<128xf32> to vector<128x1xf32>
    %c0_9 = arith.constant 0 : index
    %c0_10 = arith.constant 0 : index
    %13 = memref.load %arg5[%c0_9, %c0_10] : memref<1x1xf32, #tpu.memory_space<smem>>
    %14 = vector.broadcast %13 : f32 to vector<128x1xf32>
    %15 = arith.addf %12, %14 : vector<128x1xf32>
    %cst_11 = arith.constant 0.000000e+00 : f32
    %16 = vector.broadcast %cst_11 : f32 to vector<128x1xf32>
    %17 = arith.maximumf %15, %16 : vector<128x1xf32>
    %cst_12 = arith.constant 0.000000e+00 : f32
    %18 = vector.broadcast %cst_12 : f32 to vector<128x1xf32>
    %19 = arith.subf %18, %17 : vector<128x1xf32>
    %20 = math.exp %19 : vector<128x1xf32>
    %cst_13 = arith.constant 1.000000e+00 : f32
    %21 = vector.broadcast %cst_13 : f32 to vector<128x1xf32>
    %22 = arith.addf %21, %20 : vector<128x1xf32>
    %23 = tpu.reciprocal %22 {approx = true} : vector<128x1xf32> -> vector<128x1xf32>
    %c0_14 = arith.constant 0 : index
    %c0_15 = arith.constant 0 : index
    %24 = vector.load %arg6[%c0_14, %c0_15] : memref<128x1xf32, #tpu.memory_space<vmem>>, vector<128x1xf32>
    tpu.vector_store %arg6[%c0_14, %c0_15], %23 {strides = array<i32>} : memref<128x1xf32, #tpu.memory_space<vmem>>, vector<128x1xf32>,
    return
  }
  func.func @transform_0(%arg0: i32) -> (i32, i32) {
    %c0_i32 = arith.constant 0 : i32
    %c0_i32_0 = arith.constant 0 : i32
    return %arg0, %c0_i32 : i32, i32
  }
  func.func @transform_1(%arg0: i32) -> (i32, i32) {
    %c0_i32 = arith.constant 0 : i32
    %c0_i32_0 = arith.constant 0 : i32
    %c0_i32_1 = arith.constant 0 : i32
    return %c0_i32, %c0_i32_0 : i32, i32
  }
  func.func @transform_2(%arg0: i32) -> (i32, i32) {
    %c0_i32 = arith.constant 0 : i32
    %c0_i32_0 = arith.constant 0 : i32
    %c0_i32_1 = arith.constant 0 : i32
    return %c0_i32, %c0_i32_0 : i32, i32
  }
  func.func @transform_3(%arg0: i32) -> (i32, i32) {
    %c0_i32 = arith.constant 0 : i32
    %c0_i32_0 = arith.constant 0 : i32
    %c0_i32_1 = arith.constant 0 : i32
    return %c0_i32, %c0_i32_0 : i32, i32
  }
  func.func @transform_4(%arg0: i32) -> (i32, i32) {
    %c0_i32 = arith.constant 0 : i32
    %c0_i32_0 = arith.constant 0 : i32
    %c0_i32_1 = arith.constant 0 : i32
    return %c0_i32, %c0_i32_0 : i32, i32
  }
  func.func @transform_5(%arg0: i32) -> (i32, i32) {
    %c0_i32 = arith.constant 0 : i32
    %c0_i32_0 = arith.constant 0 : i32
    return %arg0, %c0_i32 : i32, i32
  }
}

</mosaic_0001>

<llo_original>
// kernel: tpu_custom_call.1
$region0: #{tpu_custom_call.1}
  #allocation0 [shape = 'u32[]', space=smem, size = 0x4, offset = 0x4, fixed_abs, tag = 'smem constant byte address 0x4 - core index']
  #allocation1 [shape = 'u32[72,128]{1,0:T(1,128)}', space=vmem, size = 0x9000, scoped, tag = 'internal scratch']
  #allocation2 [shape = 'f32[1,1]{1,0:T(1,128)S(6)}', space=smem, size = 0x200, scoped, tag = 'scoped memory for tpu_custom_call.1']
  %s0 = inlined_call_operand.vmem [shape: f32[256,32], index: 0, kind: input, shape index: {}]
  %s1 = inlined_call_operand.vmem [shape: f32[32,128], index: 1, kind: input, shape index: {}]
  %s2 = inlined_call_operand.vmem [shape: f32[1,128], index: 2, kind: input, shape index: {}]
  %s3 = inlined_call_operand.vmem [shape: f32[1,128], index: 3, kind: input, shape index: {}]
  %s4 = inlined_call_operand.<no memory space> [shape: f32[1,1], index: 4, kind: input, shape index: {}]
  %s5 = inlined_call_operand.vmem [shape: f32[256,1], index: 5, kind: output, shape index: {}]
  %s6 = sld [smem:[#allocation0]]
  $region53: #{tpu_custom_call.1} parent=0
    _
  %s8 = ssub.s32 1, %s6
  %s9 = scalar_select 0, %s8, %s6
  %10 = sst [smem:[#allocation2]] %s4
  loop: start=0, step=1, limit=4
  $region2: #{tpu_custom_call.1} parent=0 // loop_pre_header
    _
  $region3: #{tpu_custom_call.1} parent=0 // loop_header
    %s12 = sphi 0, %s16
    %p13 = scmp.ge.s32.totalorder %s12, 4
    %s22 = sphi 0, %s24
    %s25 = sphi 0, %s22
    %s26 = sphi 0, %s25
    %s42 = sphi 0, %s26
    %s46 = sphi 0, %s46
    %s48 = sphi 0, %s46
    %s49 = sphi 0, %s48
    %s63 = sphi 0, %s49
    %s67 = sphi 0, %s67
    %s69 = sphi 0, %s67
    %s70 = sphi 0, %s69
    %s84 = sphi 0, %s70
    %s88 = sphi 0, %s88
    %s90 = sphi 0, %s88
    %s91 = sphi 0, %s90
    %s105 = sphi 0, %s91
    %s109 = sphi 0, %s109
    %s111 = sphi 0, %s109
    %s112 = sphi 0, %s111
    %s126 = sphi 0, %s112
    %s132 = sphi 0, %s134
    %s135 = sphi 0, %s132
    %s136 = sphi 0, %s135
    %s152 = sphi 0, %s136
  $region4: #{tpu_custom_call.1} parent=0 // loop_header_branch
    %15 = sbr.rel (%p13) target = $region8
  $region5: #{tpu_custom_call.1} parent=0 // loop_body
    %s17 = ssub.s32 %s12, 1
    %s18 = ssub.s32 %s12, 2
    %s19 = sadd.s32 %s12, 1
    %s20 = ssub.s32 %s12, %s19
    %p21 = scmp.eq.s32.totalorder %s20, 0
    %s23 = sadd.s32 %s22, 1
    %s24 = scalar_select %p21, %s22, %s23
    %p27 = pneg %p21
    %p28 = scmp.eq.s32.totalorder %s12, 1
    %p29 = por %p27, %p28
    %p30 = scmp.ne.s32.totalorder %s22, %s25
    %p31 = scmp.eq.s32.totalorder %s12, 0
    %p32 = por %p30, %p31
    %p33 = scmp.ne.s32.totalorder %s22, %s25
    %p34 = scmp.eq.s32.totalorder %s17, 1
    %p35 = por %p33, %p34
    %p36 = scmp.ne.s32.totalorder %s25, %s26
    %p37 = scmp.eq.s32.totalorder %s17, 0
    %p38 = por %p36, %p37
    %p39 = scmp.ne.s32.totalorder %s25, %s26
    %p40 = scmp.eq.s32.totalorder %s18, 1
    %p41 = por %p39, %p40
    %p43 = scmp.ne.s32.totalorder %s26, %s42
    %p44 = scmp.eq.s32.totalorder %s18, 0
    %p45 = por %p43, %p44
    %s47 = sadd.s32 %s46, 1
    %p50 = scmp.eq.s32.totalorder %s12, 1
    %p51 = scmp.ne.s32.totalorder %s46, %s48
    %p52 = scmp.eq.s32.totalorder %s12, 0
    %p53 = por %p51, %p52
    %p54 = scmp.ne.s32.totalorder %s46, %s48
    %p55 = scmp.eq.s32.totalorder %s17, 1
    %p56 = por %p54, %p55
    %p57 = scmp.ne.s32.totalorder %s48, %s49
    %p58 = scmp.eq.s32.totalorder %s17, 0
    %p59 = por %p57, %p58
    %p60 = scmp.ne.s32.totalorder %s48, %s49
    %p61 = scmp.eq.s32.totalorder %s18, 1
    %p62 = por %p60, %p61
    %p64 = scmp.ne.s32.totalorder %s49, %s63
    %p65 = scmp.eq.s32.totalorder %s18, 0
    %p66 = por %p64, %p65
    %s68 = sadd.s32 %s67, 1
    %p71 = scmp.eq.s32.totalorder %s12, 1
    %p72 = scmp.ne.s32.totalorder %s67, %s69
    %p73 = scmp.eq.s32.totalorder %s12, 0
    %p74 = por %p72, %p73
    %p75 = scmp.ne.s32.totalorder %s67, %s69
    %p76 = scmp.eq.s32.totalorder %s17, 1
    %p77 = por %p75, %p76
    %p78 = scmp.ne.s32.totalorder %s69, %s70
    %p79 = scmp.eq.s32.totalorder %s17, 0
    %p80 = por %p78, %p79
    %p81 = scmp.ne.s32.totalorder %s69, %s70
    %p82 = scmp.eq.s32.totalorder %s18, 1
    %p83 = por %p81, %p82
    %p85 = scmp.ne.s32.totalorder %s70, %s84
    %p86 = scmp.eq.s32.totalorder %s18, 0
    %p87 = por %p85, %p86
    %s89 = sadd.s32 %s88, 1
    %p92 = scmp.eq.s32.totalorder %s12, 1
    %p93 = scmp.ne.s32.totalorder %s88, %s90
    %p94 = scmp.eq.s32.totalorder %s12, 0
    %p95 = por %p93, %p94
    %p96 = scmp.ne.s32.totalorder %s88, %s90
    %p97 = scmp.eq.s32.totalorder %s17, 1
    %p98 = por %p96, %p97
    %p99 = scmp.ne.s32.totalorder %s90, %s91
    %p100 = scmp.eq.s32.totalorder %s17, 0
    %p101 = por %p99, %p100
    %p102 = scmp.ne.s32.totalorder %s90, %s91
    %p103 = scmp.eq.s32.totalorder %s18, 1
    %p104 = por %p102, %p103
    %p106 = scmp.ne.s32.totalorder %s91, %s105
    %p107 = scmp.eq.s32.totalorder %s18, 0
    %p108 = por %p106, %p107
    %s110 = sadd.s32 %s109, 1
    %p113 = scmp.eq.s32.totalorder %s12, 1
    %p114 = scmp.ne.s32.totalorder %s109, %s111
    %p115 = scmp.eq.s32.totalorder %s12, 0
    %p116 = por %p114, %p115
    %p117 = scmp.ne.s32.totalorder %s109, %s111
    %p118 = scmp.eq.s32.totalorder %s17, 1
    %p119 = por %p117, %p118
    %p120 = scmp.ne.s32.totalorder %s111, %s112
    %p121 = scmp.eq.s32.totalorder %s17, 0
    %p122 = por %p120, %p121
    %p123 = scmp.ne.s32.totalorder %s111, %s112
    %p124 = scmp.eq.s32.totalorder %s18, 1
    %p125 = por %p123, %p124
    %p127 = scmp.ne.s32.totalorder %s112, %s126
    %p128 = scmp.eq.s32.totalorder %s18, 0
    %p129 = por %p127, %p128
    %s130 = ssub.s32 %s12, %s19
    %p131 = scmp.eq.s32.totalorder %s130, 0
    %s133 = sadd.s32 %s132, 1
    %s134 = scalar_select %p131, %s132, %s133
    %p137 = pneg %p131
    %p138 = scmp.eq.s32.totalorder %s12, 1
    %p139 = por %p137, %p138
    %p140 = scmp.ne.s32.totalorder %s132, %s135
    %p141 = scmp.eq.s32.totalorder %s12, 0
    %p142 = por %p140, %p141
    %p143 = scmp.ne.s32.totalorder %s132, %s135
    %p144 = scmp.eq.s32.totalorder %s17, 1
    %p145 = por %p143, %p144
    %p146 = scmp.ne.s32.totalorder %s135, %s136
    %p147 = scmp.eq.s32.totalorder %s17, 0
    %p148 = por %p146, %p147
    %p149 = scmp.ne.s32.totalorder %s135, %s136
    %p150 = scmp.eq.s32.totalorder %s18, 1
    %p151 = por %p149, %p150
    %p153 = scmp.ne.s32.totalorder %s136, %s152
    %p154 = scmp.eq.s32.totalorder %s18, 0
    %p155 = por %p153, %p154
    %p156 = scmp.le.s32.totalorder 1, %s12
    %p157 = scmp.lt.s32.totalorder %s12, 3
    %p158 = pnand %p156, %p157
    %p159 = pneg %p158
    // Predicated region
    $region9: #{tpu_custom_call.1} parent=5 // pred_check
      _
    $region10: #{tpu_custom_call.1} parent=5 // pred_check_branch
      %161 = sbr.rel (%p158) target = $region12
    $region11: #{tpu_custom_call.1} parent=5 // pred_region
      %s162 = ssub.s32 %s12, 1
      // Predicated region
      $region13: #{tpu_custom_call.1} parent=11 // pred_check
        %p163 = pneg %p59
      $region14: #{tpu_custom_call.1} parent=11 // pred_check_branch
        %165 = sbr.rel (%p163) target = $region16
      $region15: #{tpu_custom_call.1} parent=11 // pred_region
        _
      $region16: #{tpu_custom_call.1} parent=11 // pred_fallthru
        _
      // Predicated region
      $region17: #{tpu_custom_call.1} parent=11 // pred_check
        %p166 = pneg %p80
      $region18: #{tpu_custom_call.1} parent=11 // pred_check_branch
        %168 = sbr.rel (%p166) target = $region20
      $region19: #{tpu_custom_call.1} parent=11 // pred_region
        _
      $region20: #{tpu_custom_call.1} parent=11 // pred_fallthru
        _
      // Predicated region
      $region21: #{tpu_custom_call.1} parent=11 // pred_check
        %p169 = pneg %p101
      $region22: #{tpu_custom_call.1} parent=11 // pred_check_branch
        %171 = sbr.rel (%p169) target = $region24
      $region23: #{tpu_custom_call.1} parent=11 // pred_region
        _
      $region24: #{tpu_custom_call.1} parent=11 // pred_fallthru
        _
      // Predicated region
      $region25: #{tpu_custom_call.1} parent=11 // pred_check
        %p172 = pneg %p122
      $region26: #{tpu_custom_call.1} parent=11 // pred_check_branch
        %174 = sbr.rel (%p172) target = $region28
      $region27: #{tpu_custom_call.1} parent=11 // pred_region
        _
      $region28: #{tpu_custom_call.1} parent=11 // pred_fallthru
        _
    $region12: #{tpu_custom_call.1} parent=5 // pred_fallthru
      _
    %p175 = scmp.lt.s32.totalorder %s12, 2
    // Predicated region
    $region29: #{tpu_custom_call.1} parent=5 // pred_check
      %p176 = pneg %p175
    $region30: #{tpu_custom_call.1} parent=5 // pred_check_branch
      %178 = sbr.rel (%p176) target = $region32
    $region31: #{tpu_custom_call.1} parent=5 // pred_region
      // Predicated region
      $region33: #{tpu_custom_call.1} parent=31 // pred_check
        %p179 = pneg %p32
      $region34: #{tpu_custom_call.1} parent=31 // pred_check_branch
        %181 = sbr.rel (%p179) target = $region36
      $region35: #{tpu_custom_call.1} parent=31 // pred_region
        %s182 = smul.u32 16, %s12
        %p183 = scmp.lt.s32.totalorder %s182, 31
        %s184 = scalar_select %p183, %s182, 31
        %s185 = smul.addr %s184, 8
        %s186 = scalar_lea.vmem %s0, %s185
        %s187 = smul.u32 16, %s12
      $region36: #{tpu_custom_call.1} parent=31 // pred_fallthru
        _
    $region32: #{tpu_custom_call.1} parent=5 // pred_fallthru
      _
    %p188 = scmp.le.s32.totalorder 1, %s12
    %p189 = scmp.lt.s32.totalorder %s12, 3
    %p190 = pnand %p188, %p189
    %p191 = pneg %p190
    // Predicated region
    $region37: #{tpu_custom_call.1} parent=5 // pred_check
      _
    $region38: #{tpu_custom_call.1} parent=5 // pred_check_branch
      %193 = sbr.rel (%p190) target = $region40
    $region39: #{tpu_custom_call.1} parent=5 // pred_region
      %s194 = ssub.s32 %s12, 1
      %s195 = smul.u32 16, %s17
      %p196 = scmp.lt.s32.totalorder %s195, 31
      %s197 = scalar_select %p196, %s195, 31
      %s198 = smul.addr %s197, 8
      %s199 = scalar_lea.vmem %s0, %s198
      %p200 = pneg %p38
      %p201 = pneg %p35
      %p202 = pneg %p59
      %p203 = pneg %p56
      %p204 = pneg %p80
      %p205 = pneg %p77
      %p206 = pneg %p101
      %p207 = pneg %p98
      %p208 = pneg %p122
      %p209 = pneg %p119
      %p210 = pneg %p148
      %p211 = pneg %p145
      %s212 = smul.u32 16, %s17
      %p213 = scmp.lt.s32.totalorder %s212, 31
      %s214 = scalar_select %p213, %s212, 31
      %s215 = smul.addr %s214, 8
      %s216 = scalar_lea.vmem %s5, %s215
      %s217 = smul.u32 16, %s17
      %p218 = scmp.lt.s32.totalorder %s217, 31
      %s219 = scalar_select %p218, %s217, 31
      %s220 = smul.addr %s219, 8
      %s221 = scalar_lea.vmem %s0, %s220
      %s222 = smul.u32 16, %s17
      %s223 = smul.u32 16, %s17
      %p224 = scmp.lt.s32.totalorder %s223, 31
      %s225 = scalar_select %p224, %s223, 31
      %s226 = smul.addr %s225, 8
      %s227 = scalar_lea.vmem %s5, %s226
      %s228 = smul.u32 16, %s17
      %v229 = vld [vmem:[%s221] sm:$0xff]
      %v230 = vld [vmem:[%s221 + $0x8] sm:$0xff]
      %v231 = vld [vmem:[%s221 + $0x10] sm:$0xff]
      %v232 = vld [vmem:[%s221 + $0x18] sm:$0xff]
      %v233 = vld [vmem:[%s221 + $0x20] sm:$0xff]
      %v234 = vld [vmem:[%s221 + $0x28] sm:$0xff]
      %v235 = vld [vmem:[%s221 + $0x30] sm:$0xff]
      %v236 = vld [vmem:[%s221 + $0x38] sm:$0xff]
      %v237 = vld [vmem:[%s221 + $0x40] sm:$0xff]
      %v238 = vld [vmem:[%s221 + $0x48] sm:$0xff]
      %v239 = vld [vmem:[%s221 + $0x50] sm:$0xff]
      %v240 = vld [vmem:[%s221 + $0x58] sm:$0xff]
      %v241 = vld [vmem:[%s221 + $0x60] sm:$0xff]
      %v242 = vld [vmem:[%s221 + $0x68] sm:$0xff]
      %v243 = vld [vmem:[%s221 + $0x70] sm:$0xff]
      %v244 = vld [vmem:[%s221 + $0x78] sm:$0xff]
      %v245 = vld [vmem:[%s1] sm:$0xff]
      %v246 = vld [vmem:[%s1 + $0x8] sm:$0xff]
      %v247 = vld [vmem:[%s1 + $0x10] sm:$0xff]
      %v248 = vld [vmem:[%s1 + $0x18] sm:$0xff]
      %v249 = vld [vmem:[%s2] sm:$0x1]
      %v251 = vperm.slane %v249, 0
      %vm253 = vcmask 261120
      %v255 = vsel %vm253, %v229, 0
      %v258 = vsel %vm253, %v230, 0
      %v261 = vsel %vm253, %v231, 0
      %v264 = vsel %vm253, %v232, 0
      %v267 = vsel %vm253, %v233, 0
      %v270 = vsel %vm253, %v234, 0
      %v273 = vsel %vm253, %v235, 0
      %v276 = vsel %vm253, %v236, 0
      %v279 = vsel %vm253, %v237, 0
      %v282 = vsel %vm253, %v238, 0
      %v285 = vsel %vm253, %v239, 0
      %v288 = vsel %vm253, %v240, 0
      %v291 = vsel %vm253, %v241, 0
      %v294 = vsel %vm253, %v242, 0
      %v297 = vsel %vm253, %v243, 0
      %v300 = vsel %vm253, %v244, 0
      %302 = vmatpush.msra.mxu0 0.0
      %303 = vmatpush.msra.mxu0 0.0
      %304 = vmatpush.msra.mxu0 0.0
      %305 = vmatpush.msra.mxu0 0.0
      %306 = vmatpush.msra.mxu0 0.0
      %307 = vmatpush.msra.mxu0 0.0
      %308 = vmatpush.msra.mxu0 0.0
      %309 = vmatpush.msra.mxu0 0.0
      %310 = vmatpush.msra.mxu0 0.0
      %311 = vmatpush.msra.mxu0 0.0
      %312 = vmatpush.msra.mxu0 0.0
      %313 = vmatpush.msra.mxu0 0.0
      %314 = vmatpush.msra.mxu0 %v248
      %315 = vmatpush.msra.mxu0 %v247
      %316 = vmatpush.msra.mxu0 %v246
      %317 = vmatpush.msra.mxu0 %v245
      %318 = vmatmul.f32.gmra.mxu0 %v255
      %v319 = vpop.f32.mrf.mxu0
      %v320 = vadd.f32 %v251, %v319
      %321 = vmatmul.f32.gmra.mxu0 %v258
      %v322 = vpop.f32.mrf.mxu0
      %v323 = vadd.f32 %v251, %v322
      %324 = vmatmul.f32.gmra.mxu0 %v261
      %v325 = vpop.f32.mrf.mxu0
      %v326 = vadd.f32 %v251, %v325
      %327 = vmatmul.f32.gmra.mxu0 %v264
      %v328 = vpop.f32.mrf.mxu0
      %v329 = vadd.f32 %v251, %v328
      %330 = vmatmul.f32.gmra.mxu0 %v267
      %v331 = vpop.f32.mrf.mxu0
      %v332 = vadd.f32 %v251, %v331
      %333 = vmatmul.f32.gmra.mxu0 %v270
      %v334 = vpop.f32.mrf.mxu0
      %v335 = vadd.f32 %v251, %v334
      %336 = vmatmul.f32.gmra.mxu0 %v273
      %v337 = vpop.f32.mrf.mxu0
      %v338 = vadd.f32 %v251, %v337
      %339 = vmatmul.f32.gmra.mxu0 %v276
      %v340 = vpop.f32.mrf.mxu0
      %v341 = vadd.f32 %v251, %v340
      %342 = vmatmul.f32.gmra.mxu0 %v279
      %v343 = vpop.f32.mrf.mxu0
      %v344 = vadd.f32 %v251, %v343
      %345 = vmatmul.f32.gmra.mxu0 %v282
      %v346 = vpop.f32.mrf.mxu0
      %v347 = vadd.f32 %v251, %v346
      %348 = vmatmul.f32.gmra.mxu0 %v285
      %v349 = vpop.f32.mrf.mxu0
      %v350 = vadd.f32 %v251, %v349
      %351 = vmatmul.f32.gmra.mxu0 %v288
      %v352 = vpop.f32.mrf.mxu0
      %v353 = vadd.f32 %v251, %v352
      %354 = vmatmul.f32.gmra.mxu0 %v291
      %v355 = vpop.f32.mrf.mxu0
      %v356 = vadd.f32 %v251, %v355
      %357 = vmatmul.f32.gmra.mxu0 %v294
      %v358 = vpop.f32.mrf.mxu0
      %v359 = vadd.f32 %v251, %v358
      %360 = vmatmul.f32.gmra.mxu0 %v297
      %v361 = vpop.f32.mrf.mxu0
      %v362 = vadd.f32 %v251, %v361
      %363 = vmatmul.f32.gmra.mxu0 %v300
      %v364 = vpop.f32.mrf.mxu0
      %v365 = vadd.f32 %v251, %v364
      %366 = vdwg.mxu0
      %v367 = vmax.f32 %v320, 0.0
      %v368 = vmax.f32 %v323, 0.0
      %v369 = vmax.f32 %v326, 0.0
      %v370 = vmax.f32 %v329, 0.0
      %v371 = vmax.f32 %v332, 0.0
      %v372 = vmax.f32 %v335, 0.0
      %v373 = vmax.f32 %v338, 0.0
      %v374 = vmax.f32 %v341, 0.0
      %v375 = vmax.f32 %v344, 0.0
      %v376 = vmax.f32 %v347, 0.0
      %v377 = vmax.f32 %v350, 0.0
      %v378 = vmax.f32 %v353, 0.0
      %v379 = vmax.f32 %v356, 0.0
      %v380 = vmax.f32 %v359, 0.0
      %v381 = vmax.f32 %v362, 0.0
      %v382 = vmax.f32 %v365, 0.0
      %v383 = vld [vmem:[%s3] sm:$0x1]
      %v385 = vperm.slane %v383, 0
      %v387 = vmul.f32 %v367, %v385
      %v388 = vmul.f32 %v368, %v385
      %v389 = vmul.f32 %v369, %v385
      %v390 = vmul.f32 %v370, %v385
      %v391 = vmul.f32 %v371, %v385
      %v392 = vmul.f32 %v372, %v385
      %v393 = vmul.f32 %v373, %v385
      %v394 = vmul.f32 %v374, %v385
      %v395 = vmul.f32 %v375, %v385
      %v396 = vmul.f32 %v376, %v385
      %v397 = vmul.f32 %v377, %v385
      %v398 = vmul.f32 %v378, %v385
      %v399 = vmul.f32 %v379, %v385
      %v400 = vmul.f32 %v380, %v385
      %v401 = vmul.f32 %v381, %v385
      %v402 = vmul.f32 %v382, %v385
      %403 = vadd.xlane.f32.xlu0 %v387
      %v404 = vpop.xlane.xlu0 %403
      %405 = vadd.xlane.f32.xlu0 %v388
      %v406 = vpop.xlane.xlu0 %405
      %407 = vadd.xlane.f32.xlu0 %v389
      %v408 = vpop.xlane.xlu0 %407
      %409 = vadd.xlane.f32.xlu0 %v390
      %v410 = vpop.xlane.xlu0 %409
      %411 = vadd.xlane.f32.xlu0 %v391
      %v412 = vpop.xlane.xlu0 %411
      %413 = vadd.xlane.f32.xlu0 %v392
      %v414 = vpop.xlane.xlu0 %413
      %415 = vadd.xlane.f32.xlu0 %v393
      %v416 = vpop.xlane.xlu0 %415
      %417 = vadd.xlane.f32.xlu0 %v394
      %v418 = vpop.xlane.xlu0 %417
      %419 = vadd.xlane.f32.xlu0 %v395
      %v420 = vpop.xlane.xlu0 %419
      %421 = vadd.xlane.f32.xlu0 %v396
      %v422 = vpop.xlane.xlu0 %421
      %423 = vadd.xlane.f32.xlu0 %v397
      %v424 = vpop.xlane.xlu0 %423
      %425 = vadd.xlane.f32.xlu0 %v398
      %v426 = vpop.xlane.xlu0 %425
      %427 = vadd.xlane.f32.xlu0 %v399
      %v428 = vpop.xlane.xlu0 %427
      %429 = vadd.xlane.f32.xlu0 %v400
      %v430 = vpop.xlane.xlu0 %429
      %431 = vadd.xlane.f32.xlu0 %v401
      %v432 = vpop.xlane.xlu0 %431
      %433 = vadd.xlane.f32.xlu0 %v402
      %v434 = vpop.xlane.xlu0 %433
      %s435 = sld [smem:[#allocation2]]
      %v436 = vstv %s435
      %v437 = vadd.f32 %v404, %v436
      %v438 = vadd.f32 %v406, %v436
      %v439 = vadd.f32 %v408, %v436
      %v440 = vadd.f32 %v410, %v436
      %v441 = vadd.f32 %v412, %v436
      %v442 = vadd.f32 %v414, %v436
      %v443 = vadd.f32 %v416, %v436
      %v444 = vadd.f32 %v418, %v436
      %v445 = vadd.f32 %v420, %v436
      %v446 = vadd.f32 %v422, %v436
      %v447 = vadd.f32 %v424, %v436
      %v448 = vadd.f32 %v426, %v436
      %v449 = vadd.f32 %v428, %v436
      %v450 = vadd.f32 %v430, %v436
      %v451 = vadd.f32 %v432, %v436
      %v452 = vadd.f32 %v434, %v436
      %v453 = vmax.f32 %v437, 0.0
      %v454 = vmax.f32 %v438, 0.0
      %v455 = vmax.f32 %v439, 0.0
      %v456 = vmax.f32 %v440, 0.0
      %v457 = vmax.f32 %v441, 0.0
      %v458 = vmax.f32 %v442, 0.0
      %v459 = vmax.f32 %v443, 0.0
      %v460 = vmax.f32 %v444, 0.0
      %v461 = vmax.f32 %v445, 0.0
      %v462 = vmax.f32 %v446, 0.0
      %v463 = vmax.f32 %v447, 0.0
      %v464 = vmax.f32 %v448, 0.0
      %v465 = vmax.f32 %v449, 0.0
      %v466 = vmax.f32 %v450, 0.0
      %v467 = vmax.f32 %v451, 0.0
      %v468 = vmax.f32 %v452, 0.0
      %v469 = vsub.f32 0.0, %v453
      %v470 = vsub.f32 0.0, %v454
      %v471 = vsub.f32 0.0, %v455
      %v472 = vsub.f32 0.0, %v456
      %v473 = vsub.f32 0.0, %v457
      %v474 = vsub.f32 0.0, %v458
      %v475 = vsub.f32 0.0, %v459
      %v476 = vsub.f32 0.0, %v460
      %v477 = vsub.f32 0.0, %v461
      %v478 = vsub.f32 0.0, %v462
      %v479 = vsub.f32 0.0, %v463
      %v480 = vsub.f32 0.0, %v464
      %v481 = vsub.f32 0.0, %v465
      %v482 = vsub.f32 0.0, %v466
      %v483 = vsub.f32 0.0, %v467
      %v484 = vsub.f32 0.0, %v468
      %v485 = vmul.f32 %v469, 1.442695
      %v486 = vpow.pop %v485
      %v487 = vmul.f32 %v470, 1.442695
      %v488 = vpow.pop %v487
      %v489 = vmul.f32 %v471, 1.442695
      %v490 = vpow.pop %v489
      %v491 = vmul.f32 %v472, 1.442695
      %v492 = vpow.pop %v491
      %v493 = vmul.f32 %v473, 1.442695
      %v494 = vpow.pop %v493
      %v495 = vmul.f32 %v474, 1.442695
      %v496 = vpow.pop %v495
      %v497 = vmul.f32 %v475, 1.442695
      %v498 = vpow.pop %v497
      %v499 = vmul.f32 %v476, 1.442695
      %v500 = vpow.pop %v499
      %v501 = vmul.f32 %v477, 1.442695
      %v502 = vpow.pop %v501
      %v503 = vmul.f32 %v478, 1.442695
      %v504 = vpow.pop %v503
      %v505 = vmul.f32 %v479, 1.442695
      %v506 = vpow.pop %v505
      %v507 = vmul.f32 %v480, 1.442695
      %v508 = vpow.pop %v507
      %v509 = vmul.f32 %v481, 1.442695
      %v510 = vpow.pop %v509
      %v511 = vmul.f32 %v482, 1.442695
      %v512 = vpow.pop %v511
      %v513 = vmul.f32 %v483, 1.442695
      %v514 = vpow.pop %v513
      %v515 = vmul.f32 %v484, 1.442695
      %v516 = vpow.pop %v515
      %v517 = vadd.f32 %v486, 1.0
      %v518 = vadd.f32 %v488, 1.0
      %v519 = vadd.f32 %v490, 1.0
      %v520 = vadd.f32 %v492, 1.0
      %v521 = vadd.f32 %v494, 1.0
      %v522 = vadd.f32 %v496, 1.0
      %v523 = vadd.f32 %v498, 1.0
      %v524 = vadd.f32 %v500, 1.0
      %v525 = vadd.f32 %v502, 1.0
      %v526 = vadd.f32 %v504, 1.0
      %v527 = vadd.f32 %v506, 1.0
      %v528 = vadd.f32 %v508, 1.0
      %v529 = vadd.f32 %v510, 1.0
      %v530 = vadd.f32 %v512, 1.0
      %v531 = vadd.f32 %v514, 1.0
      %v532 = vadd.f32 %v516, 1.0
      %v533 = vrcp.pop %v517
      %v534 = vrcp.pop %v518
      %v535 = vrcp.pop %v519
      %v536 = vrcp.pop %v520
      %v537 = vrcp.pop %v521
      %v538 = vrcp.pop %v522
      %v539 = vrcp.pop %v523
      %v540 = vrcp.pop %v524
      %v541 = vrcp.pop %v525
      %v542 = vrcp.pop %v526
      %v543 = vrcp.pop %v527
      %v544 = vrcp.pop %v528
      %v545 = vrcp.pop %v529
      %v546 = vrcp.pop %v530
      %v547 = vrcp.pop %v531
      %v548 = vrcp.pop %v532
      %vm549 = vcmask 7168
      %550 = vst.msk [vmem:[%s227] sm:$0xff] %vm549, %v533
      %551 = vst.msk [vmem:[%s227 + $0x8] sm:$0xff] %vm549, %v534
      %552 = vst.msk [vmem:[%s227 + $0x10] sm:$0xff] %vm549, %v535
      %553 = vst.msk [vmem:[%s227 + $0x18] sm:$0xff] %vm549, %v536
      %554 = vst.msk [vmem:[%s227 + $0x20] sm:$0xff] %vm549, %v537
      %555 = vst.msk [vmem:[%s227 + $0x28] sm:$0xff] %vm549, %v538
      %556 = vst.msk [vmem:[%s227 + $0x30] sm:$0xff] %vm549, %v539
      %557 = vst.msk [vmem:[%s227 + $0x38] sm:$0xff] %vm549, %v540
      %558 = vst.msk [vmem:[%s227 + $0x40] sm:$0xff] %vm549, %v541
      %559 = vst.msk [vmem:[%s227 + $0x48] sm:$0xff] %vm549, %v542
      %560 = vst.msk [vmem:[%s227 + $0x50] sm:$0xff] %vm549, %v543
      %561 = vst.msk [vmem:[%s227 + $0x58] sm:$0xff] %vm549, %v544
      %562 = vst.msk [vmem:[%s227 + $0x60] sm:$0xff] %vm549, %v545
      %563 = vst.msk [vmem:[%s227 + $0x68] sm:$0xff] %vm549, %v546
      %564 = vst.msk [vmem:[%s227 + $0x70] sm:$0xff] %vm549, %v547
      %565 = vst.msk [vmem:[%s227 + $0x78] sm:$0xff] %vm549, %v548
      %s566 = smul.u32 16, %s17
      %p567 = scmp.lt.s32.totalorder %s566, 31
      %s568 = scalar_select %p567, %s566, 31
      %s569 = smul.addr %s568, 8
      %s570 = scalar_lea.vmem %s5, %s569
      // Predicated region
      $region41: #{tpu_custom_call.1} parent=39 // pred_check
        %p571 = pneg %p145
      $region42: #{tpu_custom_call.1} parent=39 // pred_check_branch
        %573 = sbr.rel (%p571) target = $region44
      $region43: #{tpu_custom_call.1} parent=39 // pred_region
        %s574 = smul.u32 16, %s17
      $region44: #{tpu_custom_call.1} parent=39 // pred_fallthru
        _
    $region40: #{tpu_custom_call.1} parent=5 // pred_fallthru
      _
    %p575 = scmp.le.s32.totalorder 2, %s12
    // Predicated region
    $region45: #{tpu_custom_call.1} parent=5 // pred_check
      %p576 = pneg %p575
    $region46: #{tpu_custom_call.1} parent=5 // pred_check_branch
      %578 = sbr.rel (%p576) target = $region48
    $region47: #{tpu_custom_call.1} parent=5 // pred_region
      %s579 = ssub.s32 %s12, 2
      // Predicated region
      $region49: #{tpu_custom_call.1} parent=47 // pred_check
        %p580 = pneg %p151
      $region50: #{tpu_custom_call.1} parent=47 // pred_check_branch
        %582 = sbr.rel (%p580) target = $region52
      $region51: #{tpu_custom_call.1} parent=47 // pred_region
        %s583 = smul.u32 16, %s18
        %p584 = scmp.lt.s32.totalorder %s583, 31
        %s585 = scalar_select %p584, %s583, 31
        %s586 = smul.addr %s585, 8
        %s587 = scalar_lea.vmem %s5, %s586
      $region52: #{tpu_custom_call.1} parent=47 // pred_fallthru
        _
    $region48: #{tpu_custom_call.1} parent=5 // pred_fallthru
      _
  $region6: #{tpu_custom_call.1} parent=0 // loop_footer
    %s16 = sadd.s32 1, %s12
  $region7: #{tpu_custom_call.1} parent=0 // loop_footer_branch
    %11 = sbr.rel target = $region3
  $region8: #{tpu_custom_call.1} parent=0 // loop_exit
    _

</llo_original>
